<compile_context>
chip_gen: v7x
topology: tpu7x:2x2x1
jax: 0.10.0
libtpu: 0.0.40
codegen_flags: <defaults>
</compile_context>

<pallas_src>
from functools import partial

import jax
import jax.numpy as jnp
from jax import lax
from jax.experimental import pallas as pl
from jax.experimental.pallas import tpu as pltpu


def _round_up(x, m):
    return ((x + m - 1) // m) * m


def _kl_div_kernel(v_ref, a_ref, o_ref, *, total_rows):
    i = pl.program_id(0)
    tb = v_ref.shape[0]

    # Upcast inside the kernel so bf16 inputs only pay bf16 HBM traffic.
    v = v_ref[...].astype(jnp.float32)   # [TB, D]
    a = a_ref[...].astype(jnp.float32)   # [TB, D]

    # softmax(vision, dim=1) pieces (numerically stable).
    v_max = jnp.max(v, axis=1, keepdims=True)
    v_shift = v - v_max
    v_exp = jnp.exp(v_shift)
    v_sum = jnp.sum(v_exp, axis=1, keepdims=True)
    log_vsum = jnp.log(v_sum)
    inv_vsum = pl.reciprocal(v_sum, approx=False)    # per-row, negligible cost

    # log_softmax(audio, dim=1) pieces.
    a_max = jnp.max(a, axis=1, keepdims=True)
    a_shift = a - a_max
    a_lse = jnp.log(jnp.sum(jnp.exp(a_shift), axis=1, keepdims=True))

    # Fused KL per row:
    #   sum_d p*(log p - log q)
    #     = (1/v_sum) * sum_d v_exp*(v_shift - a_shift) + (a_lse - log_vsum)
    # (since sum_d p = 1). One [TB,D] subtract + multiply + row-sum.
    dot_pv = jnp.sum(v_exp * (v_shift - a_shift), axis=1, keepdims=True)
    row_kl = dot_pv * inv_vsum + (a_lse - log_vsum)              # [TB, 1]

    # Mask padded rows of the ragged last tile. MUST stay a select: padded
    # rows hold unspecified data and may yield NaN/Inf, which the select
    # discards (a multiply-by-mask would not).
    row_ids = i * tb + lax.broadcasted_iota(jnp.int32, (tb, 1), 0)
    row_kl = jnp.where(row_ids < total_rows, row_kl, 0.0)

    tile_sum = jnp.sum(row_kl)
    # Lane-dense (1, 128) partial-sum output block (unmasked vst).
    o_ref[...] = jnp.full(o_ref.shape, tile_sum, dtype=o_ref.dtype)


# Explicit scoped-VMEM limit: raises v5e's 16 MiB default, fits under v7x's
# 64 MiB physical with headroom, trivially fits v5e/v6e's 128 MiB physical.
_VMEM_LIMIT_BYTES = 48 * 1024 * 1024
# Target total kernel footprint (inputs + temps) kept below the limit.
_FOOTPRINT_BUDGET = 40 * 1024 * 1024
# Approximate number of live [TB, D] f32 intermediates in the fused kernel
# (upcast v, a, v_shift, v_exp, a_shift, product) — conservative.
_F32_TEMPS = 6


def kl_divergence_loss(vision_feature, audio_feature, *, block_rows=None):
    """Pallas TPU implementation of LossFunction.forward (KLDivLoss batchmean)."""
    assert vision_feature.shape == audio_feature.shape
    B, D = vision_feature.shape
    itemsize = jnp.dtype(vision_feature.dtype).itemsize
    sub = 8 if itemsize >= 4 else 16          # sublane packing (f32 vs bf16/fp8)

    if block_rows is None:
        # Per-row bytes: 2 inputs x 2 pipeline buffers x itemsize, plus the
        # live f32 intermediates the kernel keeps per tile.
        per_row_bytes = D * (4 * itemsize + _F32_TEMPS * 4)
        block_rows = _FOOTPRINT_BUDGET // max(1, per_row_bytes)
        # Big tiles amortize the ~0.35us/step overhead for small D; cap so a
        # pathological D doesn't blow the budget math.
        block_rows = max(sub, min(4096, block_rows))

    block_rows = min(_round_up(B, sub), _round_up(block_rows, sub))

    # Megacore (v7x): the grid axis is the only thing shardable across the 2
    # TensorCores; make sure there are at least 2 tiles whenever B can split.
    if pl.cdiv(B, block_rows) < 2 and B > sub:
        block_rows = _round_up(pl.cdiv(B, 2), sub)

    num_tiles = pl.cdiv(B, block_rows)

    kernel = partial(_kl_div_kernel, total_rows=B)

    partials = pl.pallas_call(
        kernel,
        out_shape=jax.ShapeDtypeStruct((num_tiles, 128), jnp.float32),
        grid_spec=pl.GridSpec(
            grid=(num_tiles,),
            in_specs=[
                pl.BlockSpec((block_rows, D), lambda i: (i, 0)),
                pl.BlockSpec((block_rows, D), lambda i: (i, 0)),
            ],
            out_specs=pl.BlockSpec((1, 128), lambda i: (i, 0)),
        ),
        compiler_params=pltpu.CompilerParams(
            dimension_semantics=("parallel",),   # batch tiles independent
            vmem_limit_bytes=_VMEM_LIMIT_BYTES,
        ),
    )(vision_feature, audio_feature)

    # Tiny final reduction + batchmean normalization in plain JAX.
    return jnp.sum(partials[:, 0]) / B


def _reference(vision_feature, audio_feature):
    # Pure-JAX reference mirroring torch.nn.KLDivLoss(reduction='batchmean')
    # applied to (log_softmax(audio), softmax(vision)).
    v = vision_feature.astype(jnp.float32)
    a = audio_feature.astype(jnp.float32)
    log_p = jax.nn.log_softmax(v, axis=1)
    p = jnp.exp(log_p)
    log_q = jax.nn.log_softmax(a, axis=1)
    return jnp.sum(p * (log_p - log_q)) / v.shape[0]


if __name__ == "__main__":
    key = jax.random.PRNGKey(0)
    k1, k2, k3, k4 = jax.random.split(key, 4)

    # Case 1: small, tile-friendly f32 features.
    B1, D1 = 8, 128
    vision1 = jax.random.normal(k1, (B1, D1), dtype=jnp.float32)
    audio1 = jax.random.normal(k2, (B1, D1), dtype=jnp.float32)
    loss1 = kl_divergence_loss(vision1, audio1)
    jax.block_until_ready(loss1)
    ref1 = _reference(vision1, audio1)
    assert jnp.allclose(loss1, ref1, rtol=1e-5, atol=1e-5), (loss1, ref1)

    # Case 2: multi-tile grid with a ragged last tile (exercises the per-row
    # masking and the "parallel" per-tile partial-sum path).
    B2, D2 = 20, 256
    vision2 = jax.random.normal(k3, (B2, D2), dtype=jnp.float32)
    audio2 = jax.random.normal(k4, (B2, D2), dtype=jnp.float32)
    loss2 = kl_divergence_loss(vision2, audio2, block_rows=16)
    jax.block_until_ready(loss2)
    ref2 = _reference(vision2, audio2)
    assert jnp.allclose(loss2, ref2, rtol=1e-5, atol=1e-5), (loss2, ref2)

    # Case 3: bf16 ingestion (upcast happens inside the kernel; reference sees
    # the same bf16 inputs so f32 math matches tightly). Also exercises the
    # autosizer + the >=2-tiles megacore split (B=32 > sublane 16 -> 2 tiles).
    B3, D3 = 32, 128
    vision3 = jax.random.normal(k1, (B3, D3), dtype=jnp.float32).astype(jnp.bfloat16)
    audio3 = jax.random.normal(k2, (B3, D3), dtype=jnp.float32).astype(jnp.bfloat16)
    loss3 = kl_divergence_loss(vision3, audio3)
    jax.block_until_ready(loss3)
    ref3 = _reference(vision3, audio3)
    assert jnp.allclose(loss3, ref3, rtol=1e-4, atol=1e-4), (loss3, ref3)

    print("KERNEL_OK")
</pallas_src>

<mosaic_0001>
module attributes {stable_mosaic.version = 11 : i64} {
  func.func @_kl_div_kernel(%arg0: i32, %arg1: memref<8x128xf32, #tpu.memory_space<vmem>>, %arg2: memref<8x128xf32, #tpu.memory_space<vmem>>, %arg3: memref<1x128xf32, #tpu.memory_space<vmem>>) attributes {dimension_semantics = [#tpu.dimension_semantics<parallel>], iteration_bounds = array<i64: 1>, scalar_prefetch = 0 : i64, scratch_operands = 0 : i64, tpu.core_type = #tpu.core_type<tc>, window_params = [{transform_indices = @transform_0, window_bounds = array<i64: 8, 128>}, {transform_indices = @transform_1, window_bounds = array<i64: 8, 128>}, {transform_indices = @transform_2, window_bounds = array<i64: 1, 128>}]} {
    %c0 = arith.constant 0 : index
    %c0_0 = arith.constant 0 : index
    %0 = vector.load %arg1[%c0, %c0_0] : memref<8x128xf32, #tpu.memory_space<vmem>>, vector<8x128xf32>
    %c0_1 = arith.constant 0 : index
    %c0_2 = arith.constant 0 : index
    %1 = vector.load %arg2[%c0_1, %c0_2] : memref<8x128xf32, #tpu.memory_space<vmem>>, vector<8x128xf32>
    %cst = arith.constant dense<0xFF800000> : vector<8xf32>
    %2 = vector.multi_reduction <maximumf>, %0, %cst [1] : vector<8x128xf32> to vector<8xf32>
    %3 = vector.shape_cast %2 : vector<8xf32> to vector<8x1xf32>
    %4 = vector.broadcast %3 : vector<8x1xf32> to vector<8x128xf32>
    %5 = arith.subf %0, %4 : vector<8x128xf32>
    %6 = math.exp %5 : vector<8x128xf32>
    %cst_3 = arith.constant dense<0.000000e+00> : vector<8xf32>
    %7 = vector.multi_reduction <add>, %6, %cst_3 [1] : vector<8x128xf32> to vector<8xf32>
    %8 = vector.shape_cast %7 : vector<8xf32> to vector<8x1xf32>
    %9 = math.log %8 : vector<8x1xf32>
    %10 = tpu.reciprocal %8 : vector<8x1xf32> -> vector<8x1xf32>
    %cst_4 = arith.constant dense<0xFF800000> : vector<8xf32>
    %11 = vector.multi_reduction <maximumf>, %1, %cst_4 [1] : vector<8x128xf32> to vector<8xf32>
    %12 = vector.shape_cast %11 : vector<8xf32> to vector<8x1xf32>
    %13 = vector.broadcast %12 : vector<8x1xf32> to vector<8x128xf32>
    %14 = arith.subf %1, %13 : vector<8x128xf32>
    %15 = math.exp %14 : vector<8x128xf32>
    %cst_5 = arith.constant dense<0.000000e+00> : vector<8xf32>
    %16 = vector.multi_reduction <add>, %15, %cst_5 [1] : vector<8x128xf32> to vector<8xf32>
    %17 = vector.shape_cast %16 : vector<8xf32> to vector<8x1xf32>
    %18 = math.log %17 : vector<8x1xf32>
    %19 = arith.subf %5, %14 : vector<8x128xf32>
    %20 = arith.mulf %6, %19 : vector<8x128xf32>
    %cst_6 = arith.constant dense<0.000000e+00> : vector<8xf32>
    %21 = vector.multi_reduction <add>, %20, %cst_6 [1] : vector<8x128xf32> to vector<8xf32>
    %22 = vector.shape_cast %21 : vector<8xf32> to vector<8x1xf32>
    %23 = arith.mulf %22, %10 : vector<8x1xf32>
    %24 = arith.subf %18, %9 : vector<8x1xf32>
    %25 = arith.addf %23, %24 : vector<8x1xf32>
    %c8_i32 = arith.constant 8 : i32
    %26 = arith.muli %arg0, %c8_i32 : i32
    %27 = tpu.iota {dimensions = array<i32: 0>} : vector<8x1xi32>
    %28 = vector.broadcast %26 : i32 to vector<8x1xi32>
    %29 = arith.addi %28, %27 : vector<8x1xi32>
    %c8_i32_7 = arith.constant 8 : i32
    %30 = vector.broadcast %c8_i32_7 : i32 to vector<8x1xi32>
    %31 = arith.cmpi slt, %29, %30 : vector<8x1xi32>
    %cst_8 = arith.constant 0.000000e+00 : f32
    %32 = vector.broadcast %cst_8 : f32 to vector<8x1xf32>
    %33 = arith.select %31, %25, %32 : vector<8x1xi1>, vector<8x1xf32>
    %34 = vector.shape_cast %33 : vector<8x1xf32> to vector<1x8x1xf32>
    %cst_9 = arith.constant dense<0.000000e+00> : vector<1xf32>
    %35 = vector.multi_reduction <add>, %34, %cst_9 [1, 2] : vector<1x8x1xf32> to vector<1xf32>
    %36 = vector.shape_cast %35 : vector<1xf32> to vector<1x1x1xf32>
    %37 = vector.extract %36[0, 0, 0] : f32 from vector<1x1x1xf32>
    %38 = vector.broadcast %37 : f32 to vector<1x128xf32>
    %c0_10 = arith.constant 0 : index
    %c0_11 = arith.constant 0 : index
    %39 = vector.load %arg3[%c0_10, %c0_11] : memref<1x128xf32, #tpu.memory_space<vmem>>, vector<1x128xf32>
    tpu.vector_store %arg3[%c0_10, %c0_11], %38 {strides = array<i32>} : memref<1x128xf32, #tpu.memory_space<vmem>>, vector<1x128xf32>,
    return
  }
  func.func @transform_0(%arg0: i32) -> (i32, i32) {
    %c0_i32 = arith.constant 0 : i32
    %c0_i32_0 = arith.constant 0 : i32
    return %arg0, %c0_i32 : i32, i32
  }
  func.func @transform_1(%arg0: i32) -> (i32, i32) {
    %c0_i32 = arith.constant 0 : i32
    %c0_i32_0 = arith.constant 0 : i32
    return %arg0, %c0_i32 : i32, i32
  }
  func.func @transform_2(%arg0: i32) -> (i32, i32) {
    %c0_i32 = arith.constant 0 : i32
    %c0_i32_0 = arith.constant 0 : i32
    return %arg0, %c0_i32 : i32, i32
  }
}

</mosaic_0001>

<llo_original>
// kernel: tpu_custom_call.1
$region0: #{tpu_custom_call.1}
  #allocation0 [shape = 'u32[]', space=smem, size = 0x4, offset = 0x4, fixed_abs, tag = 'smem constant byte address 0x4 - core index']
  #allocation1 [shape = 'u32[144,128]{1,0:T(1,128)}', space=vmem, size = 0x12000, scoped, tag = 'internal scratch']
  %s0 = inlined_call_operand.hbm [shape: f32[8,128], index: 0, kind: input, shape index: {}]
  %s1 = inlined_call_operand.hbm [shape: f32[8,128], index: 1, kind: input, shape index: {}]
  %s2 = inlined_call_operand.hbm [shape: f32[1,128], index: 2, kind: output, shape index: {}]
  %s3 = sld [smem:[#allocation0]]
  $region26: #{tpu_custom_call.1} parent=0
    _
  %s5 = ssub.s32 1, %s3
  %s6 = scalar_select 0, %s5, %s3
  $region1: #{tpu_custom_call.1} parent=0
    #allocation2 [shape = 'u8[4096]{0}', space=vmem, size = 0x1000, scoped, tag = 'input window, operand 0, single buffered']
    #allocation3 [shape = 's32[1]{0}', space=sflag, size = 0x4, scoped, tag = 'scoped memory for tpu_custom_call.1']
    #allocation4 [shape = 's32[1]{0}', space=sflag, size = 0x4, scoped, tag = 'scoped memory for tpu_custom_call.1']
    #allocation5 [shape = 'u8[4096]{0}', space=vmem, size = 0x1000, scoped, tag = 'input window, operand 1, single buffered']
    #allocation6 [shape = 's32[1]{0}', space=sflag, size = 0x4, scoped, tag = 'scoped memory for tpu_custom_call.1']
    #allocation7 [shape = 'u8[512]{0}', space=vmem, size = 0x400, scoped, tag = 'output window, operand 0, single buffered']
    %7 = vsyncpa [#allocation3], 0
    %8 = vsyncpa [#allocation6], 0
    %9 = vsyncpa [#allocation4], 0
    // Predicated region
    $region2: #{tpu_custom_call.1} parent=1 // pred_check
      _
    $region3: #{tpu_custom_call.1} parent=1 // pred_check_branch
      %11 = sbr.rel (0) target = $region5
    $region4: #{tpu_custom_call.1} parent=1 // pred_region
      %s13 = ssub.s32 128, 128
      %14 = vsyncadd [#allocation3], %s13
      %s16 = sshll.u32 [#allocation2], 4
      %s17 = int_to_ptr.vmem [resolvable:$true] %s16
      %19 = dma.hbm_to_vmem [thread:$0]  %s0, 128, %s17, [#allocation3]
    $region5: #{tpu_custom_call.1} parent=1 // pred_fallthru
      _
    // Predicated region
    $region6: #{tpu_custom_call.1} parent=1 // pred_check
      _
    $region7: #{tpu_custom_call.1} parent=1 // pred_check_branch
      %21 = sbr.rel (0) target = $region9
    $region8: #{tpu_custom_call.1} parent=1 // pred_region
      %s23 = ssub.s32 128, 128
      %24 = vsyncadd [#allocation6], %s23
      %s26 = sshll.u32 [#allocation5], 4
      %s27 = int_to_ptr.vmem [resolvable:$true] %s26
      %29 = dma.hbm_to_vmem [thread:$0]  %s1, 128, %s27, [#allocation6]
    $region9: #{tpu_custom_call.1} parent=1 // pred_fallthru
      _
    // Predicated region
    $region10: #{tpu_custom_call.1} parent=1 // pred_check
      _
    $region11: #{tpu_custom_call.1} parent=1 // pred_check_branch
      %31 = sbr.rel (0) target = $region13
    $region12: #{tpu_custom_call.1} parent=1 // pred_region
      %32 = dma.done [#allocation3], 128
    $region13: #{tpu_custom_call.1} parent=1 // pred_fallthru
      _
    // Predicated region
    $region14: #{tpu_custom_call.1} parent=1 // pred_check
      _
    $region15: #{tpu_custom_call.1} parent=1 // pred_check_branch
      %34 = sbr.rel (0) target = $region17
    $region16: #{tpu_custom_call.1} parent=1 // pred_region
      %35 = dma.done [#allocation6], 128
    $region17: #{tpu_custom_call.1} parent=1 // pred_fallthru
      _
    %v36 = vld [vmem:[#allocation2] sm:$0xff]
    %v37 = vld [vmem:[#allocation5] sm:$0xff]
    %38 = vmax.xlane.f32.xlu0 %v36
    %v39 = vpop.xlane.xlu0 %38
    %v40 = vsub.f32 %v36, %v39
    %v41 = vmul.f32 %v40, 1.442695
    %v42 = vpow.pop %v41
    %43 = vadd.xlane.f32.xlu0 %v42
    %v44 = vpop.xlane.xlu0 %43
    %v45 = vlog2.pop %v44
    %v46 = vmul.f32 %v45, 0.6931472
    %v47 = vrcp.pop %v44
    %48 = vmax.xlane.f32.xlu0 %v37
    %v49 = vpop.xlane.xlu0 %48
    %v50 = vsub.f32 %v37, %v49
    %v51 = vmul.f32 %v50, 1.442695
    %v52 = vpow.pop %v51
    %53 = vadd.xlane.f32.xlu0 %v52
    %v54 = vpop.xlane.xlu0 %53
    %v55 = vlog2.pop %v54
    %v56 = vmul.f32 %v55, 0.6931472
    %v57 = vsub.f32 %v40, %v50
    %v58 = vmul.f32 %v42, %v57
    %59 = vadd.xlane.f32.xlu0 %v58
    %v60 = vpop.xlane.xlu0 %59
    %v61 = vmul.f32 %v60, %v47
    %v62 = vsub.f32 %v56, %v46
    %v63 = vadd.f32 %v61, %v62
    %s64 = smul.u32 0, 8
    %v65 = vlaneseq
    %v66 = vshrl.u32 %v65, 7
    %v67 = vstv %s64
    %v68 = vadd.s32 %v67, %v66
    %vm69 = vcmp.lt.s32.totalorder %v68, 8
    %v70 = vsel %vm69, %v63, 0.0
    %vm71 = vcmask 7168
    %v72 = vsel %vm71, %v70, 0.0
    %73 = vadd.xlane.f32.xlu0 %v72
    %v74 = vpop.xlane.xlu0 %73
    %v75 = vrot.slane %v74, 4
    %v76 = vadd.f32 %v74, %v75
    %v77 = vrot.slane %v76, 2
    %v78 = vadd.f32 %v76, %v77
    %v79 = vrot.slane %v78, 1
    %v80 = vadd.f32 %v78, %v79
    %s81 = vtos %v80
    %v82 = vstv %s81
    %83 = vst [vmem:[#allocation7] sm:$0x1] %v82
    // Predicated region
    $region18: #{tpu_custom_call.1} parent=1 // pred_check
      _
    $region19: #{tpu_custom_call.1} parent=1 // pred_check_branch
      %85 = sbr.rel (0) target = $region21
    $region20: #{tpu_custom_call.1} parent=1 // pred_region
      %s87 = ssub.s32 16, 16
      %88 = vsyncadd [#allocation4], %s87
      %s90 = sshll.u32 [#allocation7], 4
      %s91 = int_to_ptr.vmem [resolvable:$true] %s90
      %93 = dma.vmem_to_hbm [thread:$0]  %s91, 16, %s2, [#allocation4]
    $region21: #{tpu_custom_call.1} parent=1 // pred_fallthru
      _
    // Predicated region
    $region22: #{tpu_custom_call.1} parent=1 // pred_check
      _
    $region23: #{tpu_custom_call.1} parent=1 // pred_check_branch
      %95 = sbr.rel (0) target = $region25
    $region24: #{tpu_custom_call.1} parent=1 // pred_region
      %96 = dma.done [#allocation4], 16
    $region25: #{tpu_custom_call.1} parent=1 // pred_fallthru
      _
    %97 = vsyncpa [#allocation3], 1
    %98 = vsyncpa [#allocation6], 1
    %99 = vsyncpa [#allocation4], 1

</llo_original>
